<compile_context>
chip_gen: v7x
topology: tpu7x:2x2x1
jax: 0.10.0
libtpu: 0.0.40
codegen_flags: <defaults>
</compile_context>

<pallas_src>
import functools

import jax
import jax.numpy as jnp
from jax.experimental import pallas as pl
from jax.experimental.pallas import tpu as pltpu


def _scale_kernel(scale_ref, x_ref, o_ref):
    # scale_ref: (1,) float32 in SMEM; x_ref / o_ref: lane-dense VMEM tiles.
    s = scale_ref[0]
    o_ref[...] = (x_ref[...].astype(jnp.float32) * s).astype(o_ref.dtype)


@functools.lru_cache(maxsize=1)
def _chip_profile():
    """Best-effort TPU generation / VMEM query with safe fallbacks."""
    kind = ""
    try:
        kind = jax.devices()[0].device_kind.lower()
    except Exception:
        pass
    is_v7x = any(tag in kind for tag in ("v7", "tpu7", "7x"))

    vmem_phys = None
    try:
        vmem_phys = int(pltpu.get_tpu_info().vmem_capacity_bytes)
    except Exception:
        pass
    if not vmem_phys:
        vmem_phys = (64 << 20) if is_v7x else (128 << 20)

    return {
        "is_v7x": is_v7x,
        # Leave headroom for Mosaic internal scratch: 48 MiB on v7x (64 MiB
        # physical), up to 96 MiB on the 128 MiB-VMEM chips.
        "vmem_cap": min(96 << 20, (vmem_phys * 3) // 4),
        # Per-step overhead is ~3x more expensive relative to stream time at
        # v7x's 3.2 TB/s, so use bigger blocks there.
        "block_target": (8 << 20) if is_v7x else (4 << 20),
        # v7x: 2 TCs x 2 for intra-TC double buffering (keep step count even).
        # v5e/v6e: 3 steps so the pipeline reaches steady state.
        "min_steps": 4 if is_v7x else 3,
        # Small-input crossover scales with HBM bandwidth.
        "fast_path_bytes": (1 << 20) if is_v7x else (256 << 10),
    }


def _lane_dense_shape(total: int):
    """(rows, lanes) with lanes a multiple of 128, or None if unobtainable."""
    for lane in (1024, 512, 256, 128):
        if total % lane == 0:
            return total // lane, lane
    return None  # total not a multiple of 128 -> let XLA fuse the multiply


def _pick_tile_rows(m: int, row_bytes: int, itemsize: int, profile) -> int:
    """Rows per block: dtype-packed sublane alignment, enough grid steps for
    megacore + pipeline steady state, blocks near the per-chip byte target."""
    # Rows per packed sublane group: 8 for f32, 16 for bf16/f16, 32 for int8.
    pack = 8 * max(1, 4 // max(itemsize, 1))
    slab_bytes = m * row_bytes

    # Tiny / short slabs: one full block (full-dim blocks are always legal).
    if m <= pack or slab_bytes <= (1 << 20):
        return m

    steps = max(profile["min_steps"], -(-slab_bytes // profile["block_target"]))
    if profile["is_v7x"] and steps % 2:
        steps += 1  # balance the two TensorCores
    steps = min(steps, max(1, m // pack))
    if steps <= 1:
        return m

    tm = -(-m // steps)                       # ceil
    tm = max(pack, (tm // pack) * pack)       # align down to dtype packing

    # Prefer an aligned tm that divides m exactly (no masked trailing block),
    # searching down a little from the target.
    if m % tm:
        cand = tm
        while cand >= pack and cand * 2 >= tm:
            if m % cand == 0:
                return cand
            cand -= pack
    return min(tm, m)


def scale_layer(x: jax.Array, scale, *, force_pallas: bool = False) -> jax.Array:
    """Reproduces ScaleLayer.forward: return input * scale (0-dim tensor)."""
    orig_shape = x.shape

    # PyTorch treats the 0-dim `scale` tensor as a scalar for type promotion:
    # floating inputs keep their own dtype; integer/bool inputs promote to the
    # (float32) scale dtype. The multiply itself is done in float32.
    if jnp.issubdtype(x.dtype, jnp.floating):
        out_dtype = x.dtype
    else:
        out_dtype = jnp.promote_types(x.dtype, jnp.float32)

    scale_f32 = jnp.asarray(scale, dtype=jnp.float32)

    def xla_path():
        return (x.astype(jnp.float32) * scale_f32).astype(out_dtype)

    total = 1
    for d in orig_shape:
        total *= d
    if total == 0:
        return jnp.zeros(orig_shape, out_dtype)

    profile = _chip_profile()
    in_itemsize = jnp.dtype(x.dtype).itemsize
    out_itemsize = jnp.dtype(out_dtype).itemsize

    # Small-input fast path: fixed pallas_call + grid-step overhead dwarfs the
    # HBM traffic for tiny tensors.
    if not force_pallas and total * in_itemsize < profile["fast_path_bytes"]:
        return xla_path()

    shape2d = _lane_dense_shape(total)
    if shape2d is None:
        # No 128-multiple lane width: a lane-sparse kernel would lower to
        # masked vst.msk partial stores and lose to XLA's fused multiply.
        return xla_path()
    m, w = shape2d
    x2d = x.reshape(m, w)

    row_bytes = w * max(in_itemsize, out_itemsize)
    tm = _pick_tile_rows(m, row_bytes, in_itemsize, profile)
    grid = (pl.cdiv(m, tm),)

    # in + out blocks, double-buffered, plus slack; capped per generation.
    block_bytes = tm * w * (in_itemsize + out_itemsize)
    vmem_limit = int(min(profile["vmem_cap"],
                         max(16 << 20, 2 * block_bytes + (4 << 20))))

    out2d = pl.pallas_call(
        _scale_kernel,
        out_shape=jax.ShapeDtypeStruct((m, w), out_dtype),
        grid_spec=pltpu.PrefetchScalarGridSpec(
            num_scalar_prefetch=0,
            grid=grid,
            in_specs=[
                pl.BlockSpec(memory_space=pltpu.SMEM),          # (1,) scale
                pl.BlockSpec((tm, w), lambda i: (i, 0)),        # x tile
            ],
            out_specs=pl.BlockSpec((tm, w), lambda i: (i, 0)),  # out tile
        ),
        compiler_params=pltpu.CompilerParams(
            dimension_semantics=("parallel",),
            vmem_limit_bytes=vmem_limit,
        ),
        cost_estimate=pl.CostEstimate(
            flops=total,
            transcendentals=0,
            bytes_accessed=total * (in_itemsize + out_itemsize),
        ),
    )(scale_f32.reshape(1), x2d)

    return out2d.reshape(orig_shape)


if __name__ == "__main__":
    # Deterministic parameter init, matching the module: scale = 0.0
    scale = jnp.asarray(0.0, dtype=jnp.float32)

    # Small NCHW input consistent with a conv-style search cell.
    key = jax.random.PRNGKey(0)
    x = jax.random.normal(key, (2, 4, 16, 16), dtype=jnp.float32)

    # Force the Pallas path (the input is small enough that the fast path
    # would otherwise skip the kernel).
    out = scale_layer(x, scale, force_pallas=True)
    out = jax.block_until_ready(out)

    ref = x * scale
    assert out.shape == x.shape
    assert out.dtype == x.dtype
    assert jnp.allclose(out, ref), "mismatch vs reference (scale=0)"

    # Nonzero scale to make sure the multiply is real, still through Pallas.
    scale2 = jnp.asarray(1.5, dtype=jnp.float32)
    out2 = jax.block_until_ready(scale_layer(x, scale2, force_pallas=True))
    assert jnp.allclose(out2, x * scale2), "mismatch vs reference (scale=1.5)"

    # Small-input fast path (pure jnp) agrees as well.
    out3 = jax.block_until_ready(scale_layer(x, scale2))
    assert jnp.allclose(out3, x * scale2), "mismatch vs reference (fast path)"

    # Non-128-divisible element count exercises the XLA fallback path.
    x_odd = jax.random.normal(key, (3, 7, 5), dtype=jnp.float32)
    out4 = jax.block_until_ready(scale_layer(x_odd, scale2, force_pallas=True))
    assert jnp.allclose(out4, x_odd * scale2), "mismatch vs reference (fallback)"

    print("KERNEL_OK")
</pallas_src>

<mosaic_0001>
module attributes {stable_mosaic.version = 11 : i64} {
  func.func @_scale_kernel(%arg0: i32, %arg1: memref<1xf32, #tpu.memory_space<smem>>, %arg2: memref<2x1024xf32, #tpu.memory_space<vmem>>, %arg3: memref<2x1024xf32, #tpu.memory_space<vmem>>) attributes {dimension_semantics = [#tpu.dimension_semantics<parallel>], iteration_bounds = array<i64: 1>, scalar_prefetch = 0 : i64, scratch_operands = 0 : i64, tpu.core_type = #tpu.core_type<tc>, window_params = [{transform_indices = @transform_0, window_bounds = array<i64: 1>}, {transform_indices = @transform_1, window_bounds = array<i64: 2, 1024>}, {transform_indices = @transform_2, window_bounds = array<i64: 2, 1024>}]} {
    %c0 = arith.constant 0 : index
    %0 = memref.load %arg1[%c0] : memref<1xf32, #tpu.memory_space<smem>>
    %c0_0 = arith.constant 0 : index
    %c0_1 = arith.constant 0 : index
    %1 = vector.load %arg2[%c0_0, %c0_1] : memref<2x1024xf32, #tpu.memory_space<vmem>>, vector<2x1024xf32>
    %2 = vector.broadcast %0 : f32 to vector<2x1024xf32>
    %3 = arith.mulf %1, %2 : vector<2x1024xf32>
    %c0_2 = arith.constant 0 : index
    %c0_3 = arith.constant 0 : index
    %4 = vector.load %arg3[%c0_2, %c0_3] : memref<2x1024xf32, #tpu.memory_space<vmem>>, vector<2x1024xf32>
    tpu.vector_store %arg3[%c0_2, %c0_3], %3 {strides = array<i32>} : memref<2x1024xf32, #tpu.memory_space<vmem>>, vector<2x1024xf32>,
    return
  }
  func.func @transform_0(%arg0: i32) -> i32 {
    %c0_i32 = arith.constant 0 : i32
    %c0_i32_0 = arith.constant 0 : i32
    return %c0_i32 : i32
  }
  func.func @transform_1(%arg0: i32) -> (i32, i32) {
    %c0_i32 = arith.constant 0 : i32
    %c0_i32_0 = arith.constant 0 : i32
    return %arg0, %c0_i32 : i32, i32
  }
  func.func @transform_2(%arg0: i32) -> (i32, i32) {
    %c0_i32 = arith.constant 0 : i32
    %c0_i32_0 = arith.constant 0 : i32
    return %arg0, %c0_i32 : i32, i32
  }
}

</mosaic_0001>

<llo_original>
// kernel: tpu_custom_call.1
$region0: #{tpu_custom_call.1}
  #allocation0 [shape = 'u32[]', space=smem, size = 0x4, offset = 0x4, fixed_abs, tag = 'smem constant byte address 0x4 - core index']
  #allocation1 [shape = 'u32[144,128]{1,0:T(1,128)}', space=vmem, size = 0x12000, scoped, tag = 'internal scratch']
  #allocation2 [shape = 'f32[1]{0:T(128)S(6)}', space=smem, size = 0x200, scoped, tag = 'scoped memory for tpu_custom_call.1']
  %s0 = inlined_call_operand.<no memory space> [shape: f32[1], index: 0, kind: input, shape index: {}]
  %s1 = inlined_call_operand.hbm [shape: f32[2,1024], index: 1, kind: input, shape index: {}]
  %s2 = inlined_call_operand.hbm [shape: f32[2,1024], index: 2, kind: output, shape index: {}]
  %s3 = sld [smem:[#allocation0]]
  $region22: #{tpu_custom_call.1} parent=0
    _
  %s5 = ssub.s32 1, %s3
  %s6 = scalar_select 0, %s5, %s3
  %7 = sst [smem:[#allocation2]] %s0
  $region1: #{tpu_custom_call.1} parent=0
    #allocation3 [shape = 'u8[8192]{0}', space=vmem, size = 0x2000, scoped, tag = 'input window, operand 1, single buffered']
    #allocation4 [shape = 's32[1]{0}', space=sflag, size = 0x4, scoped, tag = 'scoped memory for tpu_custom_call.1']
    #allocation5 [shape = 's32[1]{0}', space=sflag, size = 0x4, scoped, tag = 'scoped memory for tpu_custom_call.1']
    #allocation6 [shape = 'u8[8192]{0}', space=vmem, size = 0x2000, scoped, tag = 'output window, operand 0, single buffered']
    %8 = vsyncpa [#allocation4], 0
    %9 = vsyncpa [#allocation5], 0
    // Predicated region
    $region2: #{tpu_custom_call.1} parent=1 // pred_check
      _
    $region3: #{tpu_custom_call.1} parent=1 // pred_check_branch
      %11 = sbr.rel (0) target = $region5
    $region4: #{tpu_custom_call.1} parent=1 // pred_region
      _
    $region5: #{tpu_custom_call.1} parent=1 // pred_fallthru
      _
    // Predicated region
    $region6: #{tpu_custom_call.1} parent=1 // pred_check
      _
    $region7: #{tpu_custom_call.1} parent=1 // pred_check_branch
      %13 = sbr.rel (0) target = $region9
    $region8: #{tpu_custom_call.1} parent=1 // pred_region
      %s15 = ssub.s32 256, 256
      %16 = vsyncadd [#allocation4], %s15
      %s18 = sshll.u32 [#allocation3], 4
      %s19 = int_to_ptr.vmem [resolvable:$true] %s18
      %21 = dma.hbm_to_vmem [thread:$0]  %s1, 256, %s19, [#allocation4]
    $region9: #{tpu_custom_call.1} parent=1 // pred_fallthru
      _
    // Predicated region
    $region10: #{tpu_custom_call.1} parent=1 // pred_check
      _
    $region11: #{tpu_custom_call.1} parent=1 // pred_check_branch
      %23 = sbr.rel (0) target = $region13
    $region12: #{tpu_custom_call.1} parent=1 // pred_region
      %24 = dma.done [#allocation4], 256
    $region13: #{tpu_custom_call.1} parent=1 // pred_fallthru
      _
    %s25 = sld [smem:[#allocation2]]
    %v26 = vld [vmem:[#allocation3] sm:$0xff]
    %v27 = vld [vmem:[#allocation3 + $0x8] sm:$0xff]
    %v28 = vstv %s25
    %v29 = vmul.f32 %v26, %v28
    %v30 = vmul.f32 %v27, %v28
    %31 = vst [vmem:[#allocation6] sm:$0xff] %v29
    %32 = vst [vmem:[#allocation6 + $0x8] sm:$0xff] %v30
    // Predicated region
    $region14: #{tpu_custom_call.1} parent=1 // pred_check
      _
    $region15: #{tpu_custom_call.1} parent=1 // pred_check_branch
      %34 = sbr.rel (0) target = $region17
    $region16: #{tpu_custom_call.1} parent=1 // pred_region
      %s36 = ssub.s32 256, 256
      %37 = vsyncadd [#allocation5], %s36
      %s39 = sshll.u32 [#allocation6], 4
      %s40 = int_to_ptr.vmem [resolvable:$true] %s39
      %42 = dma.vmem_to_hbm [thread:$0]  %s40, 256, %s2, [#allocation5]
    $region17: #{tpu_custom_call.1} parent=1 // pred_fallthru
      _
    // Predicated region
    $region18: #{tpu_custom_call.1} parent=1 // pred_check
      _
    $region19: #{tpu_custom_call.1} parent=1 // pred_check_branch
      %44 = sbr.rel (0) target = $region21
    $region20: #{tpu_custom_call.1} parent=1 // pred_region
      %45 = dma.done [#allocation5], 256
    $region21: #{tpu_custom_call.1} parent=1 // pred_fallthru
      _
    %46 = vsyncpa [#allocation4], 1
    %47 = vsyncpa [#allocation5], 1

</llo_original>
